<compile_context>
chip_gen: v6e
topology: v6e:2x2x1
jax: 0.10.0
libtpu: 0.0.40
codegen_flags: <defaults>
</compile_context>

<pallas_src>
import functools

import jax
import jax.numpy as jnp
from jax.experimental import pallas as pl
from jax.experimental.pallas import tpu as pltpu


def _round_up(x: int, m: int) -> int:
    return (x + m - 1) // m * m


def _vmem_capacity_bytes() -> int:
    """Trace-time query of per-core VMEM capacity; conservative fallback."""
    try:
        return int(pltpu.get_tpu_info().vmem_capacity_bytes)
    except Exception:
        return 64 * 1024 * 1024  # assume v7x-like (smallest) if query fails


# ---------------------------------------------------------------------------
# Pass 1: per-graph node count -> 1/sqrt(count)
# ---------------------------------------------------------------------------
def _graph_inv_norm_kernel(gid_ref, inv_ref, cnt_ref, *, num_graphs_padded: int):
    """Accumulate int32 per-graph node counts over node tiles; emit rsqrt."""
    i = pl.program_id(0)

    @pl.when(i == 0)
    def _():
        cnt_ref[...] = jnp.zeros_like(cnt_ref)

    gid = gid_ref[...]                                            # (TN1, 1) int32
    tn = gid.shape[0]
    g_iota = jax.lax.broadcasted_iota(jnp.int32, (tn, num_graphs_padded), 1)
    onehot = (gid == g_iota).astype(jnp.int32)                    # (TN1, Gp)
    cnt_ref[...] += jnp.sum(onehot, axis=0, keepdims=True)        # (1, Gp) int32

    @pl.when(i == pl.num_programs(0) - 1)
    def _():
        cnt = cnt_ref[...].astype(jnp.float32)
        # Guard rsqrt(0) for empty/padded graph slots (never gathered anyway).
        inv_ref[...] = jnp.where(cnt > 0.0, jax.lax.rsqrt(cnt), 1.0)


def _choose_count_tile(n: int, g_pad: int) -> int:
    """Keep the (tn1, g_pad) one-hot intermediate ~<= 1 MiB."""
    tn1 = (1 * 1024 * 1024) // max(1, g_pad * 4)
    tn1 = max(8, min(512, (tn1 // 8) * 8))
    return min(tn1, _round_up(n, 8))


# ---------------------------------------------------------------------------
# Pass 2: out = feature * inv_norm_node (bandwidth-bound streaming scale)
# ---------------------------------------------------------------------------
def _scale_kernel(feat_ref, inv_ref, out_ref, *, compute_dtype):
    inv = inv_ref[...].astype(compute_dtype)                      # (TN, 1)
    feat = feat_ref[...].astype(compute_dtype)                    # (TN, F)
    out_ref[...] = (feat * inv).astype(out_ref.dtype)


def _choose_node_tile(n: int, f: int, itemsize: int, block_cap_bytes: int,
                      sub_mult: int) -> int:
    # Per-row VMEM footprint uses lane-padded width.
    per_row = max(1, _round_up(f, 128) * itemsize)
    tn = block_cap_bytes // per_row
    tn = max(sub_mult, min(1024, (tn // sub_mult) * sub_mult))
    return min(tn, _round_up(n, sub_mult))


@functools.partial(jax.jit, static_argnames=("num_graphs",))
def graph_norm(feature: jax.Array, graph_node_id: jax.Array, num_graphs: int):
    """feature: (num_nodes, feature_size); graph_node_id: (num_nodes,) int32."""
    n, f = feature.shape
    dtype = feature.dtype
    itemsize = jnp.dtype(dtype).itemsize

    # Generation-aware budgets: v7x has 64 MiB VMEM/TC, v5e/v6e have 128 MiB.
    vmem_cap = _vmem_capacity_bytes()
    small_vmem = vmem_cap <= 64 * 1024 * 1024
    block_cap_bytes = (4 if small_vmem else 8) * 1024 * 1024
    vmem_ceiling = (48 if small_vmem else 96) * 1024 * 1024

    g_pad = _round_up(max(num_graphs, 1), 128)
    gid = graph_node_id.astype(jnp.int32)

    # ---- Pass 1: per-graph 1/sqrt(node count) -------------------------------
    tn1 = _choose_count_tile(n, g_pad)
    n_pad1 = _round_up(n, tn1)
    # Padding only the tiny gid vector (not the feature matrix); padded rows
    # get gid = -1 so they never match a real graph in the count.
    gid_pad = jnp.pad(gid, (0, n_pad1 - n), constant_values=-1).reshape(n_pad1, 1)

    inv_g = pl.pallas_call(
        functools.partial(_graph_inv_norm_kernel, num_graphs_padded=g_pad),
        out_shape=jax.ShapeDtypeStruct((1, g_pad), jnp.float32),
        grid=(n_pad1 // tn1,),
        in_specs=[pl.BlockSpec((tn1, 1), lambda i: (i, 0))],
        out_specs=pl.BlockSpec((1, g_pad), lambda i: (0, 0)),
        scratch_shapes=[pltpu.VMEM((1, g_pad), jnp.int32)],
        compiler_params=pltpu.CompilerParams(
            dimension_semantics=("arbitrary",)),
    )(gid_pad)

    # ---- Per-node lookup of the per-graph scale (O(N) gather, done in XLA) --
    # TODO(synk): no efficient per-node dynamic gather primitive inside a
    # Pallas TPU kernel for large num_graphs; the gather stays in the wrapper.
    inv_node = jnp.take(inv_g[0], gid, axis=0).reshape(n, 1).astype(jnp.float32)

    # ---- Pass 2: bandwidth-bound elementwise scale --------------------------
    # bf16 stays bf16 on the VALU (v6e/v7x); everything else computes in f32.
    compute_dtype = jnp.bfloat16 if dtype == jnp.bfloat16 else jnp.float32
    sub_mult = max(8, 32 // itemsize)            # 8 for f32, 16 bf16, 32 int8
    tn = _choose_node_tile(n, f, itemsize, block_cap_bytes, sub_mult)
    n_tiles = pl.cdiv(n, tn)

    # VMEM budget: double-buffered feature-in + out blocks + inv column.
    block_vmem = tn * _round_up(f, 128) * itemsize
    vmem_est = 2 * 2 * block_vmem + 2 * tn * 4 + (2 << 20)
    vmem_limit = int(min(max(vmem_est, 8 * 1024 * 1024), vmem_ceiling))

    # No feature padding / output slicing: block last dim equals the full
    # (unpadded) feature dim; the node axis uses cdiv edge handling.
    out = pl.pallas_call(
        functools.partial(_scale_kernel, compute_dtype=compute_dtype),
        out_shape=jax.ShapeDtypeStruct((n, f), dtype),
        grid=(n_tiles,),
        in_specs=[
            pl.BlockSpec((tn, f), lambda i: (i, 0)),
            pl.BlockSpec((tn, 1), lambda i: (i, 0)),
        ],
        out_specs=pl.BlockSpec((tn, f), lambda i: (i, 0)),
        compiler_params=pltpu.CompilerParams(
            dimension_semantics=("parallel",),
            vmem_limit_bytes=vmem_limit),
    )(feature, inv_node)

    return out


def graph_norm_ref(feature, graph_node_id, num_graphs):
    counts = jax.ops.segment_sum(
        jnp.ones((feature.shape[0],), jnp.float32),
        graph_node_id,
        num_segments=num_graphs,
    )
    norm = jnp.sqrt(counts)[graph_node_id][:, None]
    return feature / norm


if __name__ == "__main__":
    key = jax.random.PRNGKey(0)

    num_nodes = 200        # not a multiple of 8 -> exercises node-edge handling
    feature_size = 96      # not a multiple of 128 -> masked lane stores
    num_graphs = 3

    feature = jax.random.normal(key, (num_nodes, feature_size), dtype=jnp.float32)
    # Three graphs with 70, 90 and 40 nodes respectively.
    graph_node_id = jnp.array([0] * 70 + [1] * 90 + [2] * 40, dtype=jnp.int32)

    out = graph_norm(feature, graph_node_id, num_graphs)
    out = jax.block_until_ready(out)

    ref = graph_norm_ref(feature, graph_node_id, num_graphs)
    assert out.shape == (num_nodes, feature_size)
    assert jnp.allclose(out, ref, atol=1e-5, rtol=1e-5)

    print("KERNEL_OK")
</pallas_src>

<mosaic_0001>
module attributes {stable_mosaic.version = 11 : i64} {
  func.func @_graph_inv_norm_kernel(%arg0: i32, %arg1: memref<200x1xi32, #tpu.memory_space<vmem>>, %arg2: memref<1x128xf32, #tpu.memory_space<vmem>>, %arg3: memref<1x128xi32, #tpu.memory_space<vmem>>) attributes {dimension_semantics = [#tpu.dimension_semantics<arbitrary>], iteration_bounds = array<i64: 1>, scalar_prefetch = 0 : i64, scratch_operands = 1 : i64, tpu.core_type = #tpu.core_type<tc>, window_params = [{transform_indices = @transform_0, window_bounds = array<i64: 200, 1>}, {pipeline_mode = #tpu.pipeline_mode<synchronous>, transform_indices = @transform_1, window_bounds = array<i64: 1, 128>}]} {
    %c0_i32 = arith.constant 0 : i32
    %0 = arith.cmpi eq, %arg0, %c0_i32 : i32
    %1 = arith.extui %0 : i1 to i32
    %c0_i32_0 = arith.constant 0 : i32
    %2 = arith.cmpi ne, %1, %c0_i32_0 : i32
    scf.if %2 {
      %c0_i32_8 = arith.constant 0 : i32
      %16 = vector.broadcast %c0_i32_8 : i32 to vector<1x128xi32>
      %c0_9 = arith.constant 0 : index
      %c0_10 = arith.constant 0 : index
      %17 = vector.load %arg3[%c0_9, %c0_10] : memref<1x128xi32, #tpu.memory_space<vmem>>, vector<1x128xi32>
      tpu.vector_store %arg3[%c0_9, %c0_10], %16 {strides = array<i32>} : memref<1x128xi32, #tpu.memory_space<vmem>>, vector<1x128xi32>,
    } else {
    }
    %c0 = arith.constant 0 : index
    %c0_1 = arith.constant 0 : index
    %3 = vector.load %arg1[%c0, %c0_1] : memref<200x1xi32, #tpu.memory_space<vmem>>, vector<200x1xi32>
    %4 = tpu.iota {dimensions = array<i32: 1>} : vector<200x128xi32>
    %5 = vector.broadcast %3 : vector<200x1xi32> to vector<200x128xi32>
    %6 = arith.cmpi eq, %5, %4 : vector<200x128xi32>
    %7 = arith.extui %6 : vector<200x128xi1> to vector<200x128xi32>
    %c0_2 = arith.constant 0 : index
    %c0_3 = arith.constant 0 : index
    %8 = vector.load %arg3[%c0_2, %c0_3] : memref<1x128xi32, #tpu.memory_space<vmem>>, vector<1x128xi32>
    %cst = arith.constant dense<0> : vector<128xi32>
    %9 = vector.multi_reduction <add>, %7, %cst [0] : vector<200x128xi32> to vector<128xi32>
    %10 = vector.shape_cast %9 : vector<128xi32> to vector<1x128xi32>
    %11 = arith.addi %8, %10 : vector<1x128xi32>
    %c0_4 = arith.constant 0 : index
    %c0_5 = arith.constant 0 : index
    %12 = vector.load %arg3[%c0_4, %c0_5] : memref<1x128xi32, #tpu.memory_space<vmem>>, vector<1x128xi32>
    tpu.vector_store %arg3[%c0_4, %c0_5], %11 {strides = array<i32>} : memref<1x128xi32, #tpu.memory_space<vmem>>, vector<1x128xi32>,
    %c0_i32_6 = arith.constant 0 : i32
    %13 = arith.cmpi eq, %arg0, %c0_i32_6 : i32
    %14 = arith.extui %13 : i1 to i32
    %c0_i32_7 = arith.constant 0 : i32
    %15 = arith.cmpi ne, %14, %c0_i32_7 : i32
    scf.if %15 {
      %c0_8 = arith.constant 0 : index
      %c0_9 = arith.constant 0 : index
      %16 = vector.load %arg3[%c0_8, %c0_9] : memref<1x128xi32, #tpu.memory_space<vmem>>, vector<1x128xi32>
      %17 = arith.sitofp %16 : vector<1x128xi32> to vector<1x128xf32>
      %cst_10 = arith.constant 0.000000e+00 : f32
      %18 = vector.broadcast %cst_10 : f32 to vector<1x128xf32>
      %19 = arith.cmpf ogt, %17, %18 : vector<1x128xf32>
      %20 = math.rsqrt %17 : vector<1x128xf32>
      %cst_11 = arith.constant 1.000000e+00 : f32
      %21 = vector.broadcast %cst_11 : f32 to vector<1x128xf32>
      %22 = arith.select %19, %20, %21 : vector<1x128xi1>, vector<1x128xf32>
      %c0_12 = arith.constant 0 : index
      %c0_13 = arith.constant 0 : index
      %23 = vector.load %arg2[%c0_12, %c0_13] : memref<1x128xf32, #tpu.memory_space<vmem>>, vector<1x128xf32>
      tpu.vector_store %arg2[%c0_12, %c0_13], %22 {strides = array<i32>} : memref<1x128xf32, #tpu.memory_space<vmem>>, vector<1x128xf32>,
    } else {
    }
    return
  }
  func.func @transform_0(%arg0: i32) -> (i32, i32) {
    %c0_i32 = arith.constant 0 : i32
    %c0_i32_0 = arith.constant 0 : i32
    return %arg0, %c0_i32 : i32, i32
  }
  func.func @transform_1(%arg0: i32) -> (i32, i32) {
    %c0_i32 = arith.constant 0 : i32
    %c0_i32_0 = arith.constant 0 : i32
    %c0_i32_1 = arith.constant 0 : i32
    return %c0_i32, %c0_i32_0 : i32, i32
  }
}

module attributes {stable_mosaic.version = 11 : i64} {
  func.func @_scale_kernel(%arg0: i32, %arg1: memref<200x96xf32, #tpu.memory_space<vmem>>, %arg2: memref<200x1xf32, #tpu.memory_space<vmem>>, %arg3: memref<200x96xf32, #tpu.memory_space<vmem>>) attributes {dimension_semantics = [#tpu.dimension_semantics<parallel>], iteration_bounds = array<i64: 1>, scalar_prefetch = 0 : i64, scratch_operands = 0 : i64, tpu.core_type = #tpu.core_type<tc>, window_params = [{transform_indices = @transform_0, window_bounds = array<i64: 200, 96>}, {transform_indices = @transform_1, window_bounds = array<i64: 200, 1>}, {transform_indices = @transform_2, window_bounds = array<i64: 200, 96>}]} {
    %c0 = arith.constant 0 : index
    %c0_0 = arith.constant 0 : index
    %0 = vector.load %arg2[%c0, %c0_0] : memref<200x1xf32, #tpu.memory_space<vmem>>, vector<200x1xf32>
    %c0_1 = arith.constant 0 : index
    %c0_2 = arith.constant 0 : index
    %1 = vector.load %arg1[%c0_1, %c0_2] : memref<200x96xf32, #tpu.memory_space<vmem>>, vector<200x96xf32>
    %2 = vector.broadcast %0 : vector<200x1xf32> to vector<200x96xf32>
    %3 = arith.mulf %1, %2 : vector<200x96xf32>
    %c0_3 = arith.constant 0 : index
    %c0_4 = arith.constant 0 : index
    %4 = vector.load %arg3[%c0_3, %c0_4] : memref<200x96xf32, #tpu.memory_space<vmem>>, vector<200x96xf32>
    tpu.vector_store %arg3[%c0_3, %c0_4], %3 {strides = array<i32>} : memref<200x96xf32, #tpu.memory_space<vmem>>, vector<200x96xf32>,
    return
  }
  func.func @transform_0(%arg0: i32) -> (i32, i32) {
    %c0_i32 = arith.constant 0 : i32
    %c0_i32_0 = arith.constant 0 : i32
    return %arg0, %c0_i32 : i32, i32
  }
  func.func @transform_1(%arg0: i32) -> (i32, i32) {
    %c0_i32 = arith.constant 0 : i32
    %c0_i32_0 = arith.constant 0 : i32
    return %arg0, %c0_i32 : i32, i32
  }
  func.func @transform_2(%arg0: i32) -> (i32, i32) {
    %c0_i32 = arith.constant 0 : i32
    %c0_i32_0 = arith.constant 0 : i32
    return %arg0, %c0_i32 : i32, i32
  }
}

</mosaic_0001>

<llo_original>
// kernel: graph_norm.3
$region0: #{graph_norm.3}
  #allocation0 [shape = 'u32[]', space=smem, size = 0x4, offset = 0x4, fixed_abs, tag = 'smem constant byte address 0x4 - core index']
  #allocation1 [shape = 'u32[144,128]{1,0:T(1,128)}', space=vmem, size = 0x12000, scoped, tag = 'internal scratch']
  %s0 = inlined_call_operand.vmem [shape: f32[200,96], index: 0, kind: input, shape index: {}]
  %s1 = inlined_call_operand.vmem [shape: f32[200,1], index: 1, kind: input, shape index: {}]
  %s2 = inlined_call_operand.vmem [shape: f32[200,96], index: 2, kind: output, shape index: {}]
  %s3 = sld [smem:[#allocation0]]
  $region18: #{graph_norm.3} parent=0
    _
  %s5 = ssub.s32 1, %s3
  %s6 = scalar_select 0, %s5, %s3
  // Predicated region
  $region2: #{graph_norm.3} parent=0 // pred_check
    _
  $region3: #{graph_norm.3} parent=0 // pred_check_branch
    %8 = sbr.rel (0) target = $region5
  $region4: #{graph_norm.3} parent=0 // pred_region
    _
  $region5: #{graph_norm.3} parent=0 // pred_fallthru
    _
  // Predicated region
  $region6: #{graph_norm.3} parent=0 // pred_check
    _
  $region7: #{graph_norm.3} parent=0 // pred_check_branch
    %10 = sbr.rel (0) target = $region9
  $region8: #{graph_norm.3} parent=0 // pred_region
    _
  $region9: #{graph_norm.3} parent=0 // pred_fallthru
    _
  %v11 = vld [vmem:[%s1] sm:$0xff]
  %v12 = vld [vmem:[%s1 + $0x8] sm:$0xff]
  %v13 = vld [vmem:[%s1 + $0x10] sm:$0xff]
  %v14 = vld [vmem:[%s1 + $0x18] sm:$0xff]
  %v15 = vld [vmem:[%s1 + $0x20] sm:$0xff]
  %v16 = vld [vmem:[%s1 + $0x28] sm:$0xff]
  %v17 = vld [vmem:[%s1 + $0x30] sm:$0xff]
  %v18 = vld [vmem:[%s1 + $0x38] sm:$0xff]
  %v19 = vld [vmem:[%s1 + $0x40] sm:$0xff]
  %v20 = vld [vmem:[%s1 + $0x48] sm:$0xff]
  %v21 = vld [vmem:[%s1 + $0x50] sm:$0xff]
  %v22 = vld [vmem:[%s1 + $0x58] sm:$0xff]
  %v23 = vld [vmem:[%s1 + $0x60] sm:$0xff]
  %v24 = vld [vmem:[%s1 + $0x68] sm:$0xff]
  %v25 = vld [vmem:[%s1 + $0x70] sm:$0xff]
  %v26 = vld [vmem:[%s1 + $0x78] sm:$0xff]
  %v27 = vld [vmem:[%s1 + $0x80] sm:$0xff]
  %v28 = vld [vmem:[%s1 + $0x88] sm:$0xff]
  %v29 = vld [vmem:[%s1 + $0x90] sm:$0xff]
  %v30 = vld [vmem:[%s1 + $0x98] sm:$0xff]
  %v31 = vld [vmem:[%s1 + $0xa0] sm:$0xff]
  %v32 = vld [vmem:[%s1 + $0xa8] sm:$0xff]
  %v33 = vld [vmem:[%s1 + $0xb0] sm:$0xff]
  %v34 = vld [vmem:[%s1 + $0xb8] sm:$0xff]
  %v35 = vld [vmem:[%s1 + $0xc0] sm:$0xff]
  %v36 = vld [vmem:[%s0] sm:$0xff]
  %v37 = vld [vmem:[%s0 + $0x8] sm:$0xff]
  %v38 = vld [vmem:[%s0 + $0x10] sm:$0xff]
  %v39 = vld [vmem:[%s0 + $0x18] sm:$0xff]
  %v40 = vld [vmem:[%s0 + $0x20] sm:$0xff]
  %v41 = vld [vmem:[%s0 + $0x28] sm:$0xff]
  %v42 = vld [vmem:[%s0 + $0x30] sm:$0xff]
  %v43 = vld [vmem:[%s0 + $0x38] sm:$0xff]
  %v44 = vld [vmem:[%s0 + $0x40] sm:$0xff]
  %v45 = vld [vmem:[%s0 + $0x48] sm:$0xff]
  %v46 = vld [vmem:[%s0 + $0x50] sm:$0xff]
  %v47 = vld [vmem:[%s0 + $0x58] sm:$0xff]
  %v48 = vld [vmem:[%s0 + $0x60] sm:$0xff]
  %v49 = vld [vmem:[%s0 + $0x68] sm:$0xff]
  %v50 = vld [vmem:[%s0 + $0x70] sm:$0xff]
  %v51 = vld [vmem:[%s0 + $0x78] sm:$0xff]
  %v52 = vld [vmem:[%s0 + $0x80] sm:$0xff]
  %v53 = vld [vmem:[%s0 + $0x88] sm:$0xff]
  %v54 = vld [vmem:[%s0 + $0x90] sm:$0xff]
  %v55 = vld [vmem:[%s0 + $0x98] sm:$0xff]
  %v56 = vld [vmem:[%s0 + $0xa0] sm:$0xff]
  %v57 = vld [vmem:[%s0 + $0xa8] sm:$0xff]
  %v58 = vld [vmem:[%s0 + $0xb0] sm:$0xff]
  %v59 = vld [vmem:[%s0 + $0xb8] sm:$0xff]
  %v60 = vld [vmem:[%s0 + $0xc0] sm:$0xff]
  %62 = vset.pattern.permute.xlu0 0
  %63 = vperm.xlu0 %62, %v11
  %v64 = vpop.permute.xlu0 %63
  %67 = vset.pattern.permute.xlu0 0
  %68 = vperm.xlu0 %67, %v12
  %v69 = vpop.permute.xlu0 %68
  %72 = vset.pattern.permute.xlu0 0
  %73 = vperm.xlu0 %72, %v13
  %v74 = vpop.permute.xlu0 %73
  %77 = vset.pattern.permute.xlu0 0
  %78 = vperm.xlu0 %77, %v14
  %v79 = vpop.permute.xlu0 %78
  %82 = vset.pattern.permute.xlu0 0
  %83 = vperm.xlu0 %82, %v15
  %v84 = vpop.permute.xlu0 %83
  %87 = vset.pattern.permute.xlu0 0
  %88 = vperm.xlu0 %87, %v16
  %v89 = vpop.permute.xlu0 %88
  %92 = vset.pattern.permute.xlu0 0
  %93 = vperm.xlu0 %92, %v17
  %v94 = vpop.permute.xlu0 %93
  %97 = vset.pattern.permute.xlu0 0
  %98 = vperm.xlu0 %97, %v18
  %v99 = vpop.permute.xlu0 %98
  %102 = vset.pattern.permute.xlu0 0
  %103 = vperm.xlu0 %102, %v19
  %v104 = vpop.permute.xlu0 %103
  %107 = vset.pattern.permute.xlu0 0
  %108 = vperm.xlu0 %107, %v20
  %v109 = vpop.permute.xlu0 %108
  %112 = vset.pattern.permute.xlu0 0
  %113 = vperm.xlu0 %112, %v21
  %v114 = vpop.permute.xlu0 %113
  %117 = vset.pattern.permute.xlu0 0
  %118 = vperm.xlu0 %117, %v22
  %v119 = vpop.permute.xlu0 %118
  %122 = vset.pattern.permute.xlu0 0
  %123 = vperm.xlu0 %122, %v23
  %v124 = vpop.permute.xlu0 %123
  %127 = vset.pattern.permute.xlu0 0
  %128 = vperm.xlu0 %127, %v24
  %v129 = vpop.permute.xlu0 %128
  %132 = vset.pattern.permute.xlu0 0
  %133 = vperm.xlu0 %132, %v25
  %v134 = vpop.permute.xlu0 %133
  %137 = vset.pattern.permute.xlu0 0
  %138 = vperm.xlu0 %137, %v26
  %v139 = vpop.permute.xlu0 %138
  %142 = vset.pattern.permute.xlu0 0
  %143 = vperm.xlu0 %142, %v27
  %v144 = vpop.permute.xlu0 %143
  %147 = vset.pattern.permute.xlu0 0
  %148 = vperm.xlu0 %147, %v28
  %v149 = vpop.permute.xlu0 %148
  %152 = vset.pattern.permute.xlu0 0
  %153 = vperm.xlu0 %152, %v29
  %v154 = vpop.permute.xlu0 %153
  %157 = vset.pattern.permute.xlu0 0
  %158 = vperm.xlu0 %157, %v30
  %v159 = vpop.permute.xlu0 %158
  %162 = vset.pattern.permute.xlu0 0
  %163 = vperm.xlu0 %162, %v31
  %v164 = vpop.permute.xlu0 %163
  %167 = vset.pattern.permute.xlu0 0
  %168 = vperm.xlu0 %167, %v32
  %v169 = vpop.permute.xlu0 %168
  %172 = vset.pattern.permute.xlu0 0
  %173 = vperm.xlu0 %172, %v33
  %v174 = vpop.permute.xlu0 %173
  %177 = vset.pattern.permute.xlu0 0
  %178 = vperm.xlu0 %177, %v34
  %v179 = vpop.permute.xlu0 %178
  %182 = vset.pattern.permute.xlu0 0
  %183 = vperm.xlu0 %182, %v35
  %v184 = vpop.permute.xlu0 %183
  %v186 = vmul.f32 %v36, %v64
  %v187 = vmul.f32 %v37, %v69
  %v188 = vmul.f32 %v38, %v74
  %v189 = vmul.f32 %v39, %v79
  %v190 = vmul.f32 %v40, %v84
  %v191 = vmul.f32 %v41, %v89
  %v192 = vmul.f32 %v42, %v94
  %v193 = vmul.f32 %v43, %v99
  %v194 = vmul.f32 %v44, %v104
  %v195 = vmul.f32 %v45, %v109
  %v196 = vmul.f32 %v46, %v114
  %v197 = vmul.f32 %v47, %v119
  %v198 = vmul.f32 %v48, %v124
  %v199 = vmul.f32 %v49, %v129
  %v200 = vmul.f32 %v50, %v134
  %v201 = vmul.f32 %v51, %v139
  %v202 = vmul.f32 %v52, %v144
  %v203 = vmul.f32 %v53, %v149
  %v204 = vmul.f32 %v54, %v154
  %v205 = vmul.f32 %v55, %v159
  %v206 = vmul.f32 %v56, %v164
  %v207 = vmul.f32 %v57, %v169
  %v208 = vmul.f32 %v58, %v174
  %v209 = vmul.f32 %v59, %v179
  %v210 = vmul.f32 %v60, %v184
  %vm211 = vcmask 785408
  %212 = vst.msk [vmem:[%s2] sm:$0xff] %vm211, %v186
  %213 = vst.msk [vmem:[%s2 + $0x8] sm:$0xff] %vm211, %v187
  %214 = vst.msk [vmem:[%s2 + $0x10] sm:$0xff] %vm211, %v188
  %215 = vst.msk [vmem:[%s2 + $0x18] sm:$0xff] %vm211, %v189
  %216 = vst.msk [vmem:[%s2 + $0x20] sm:$0xff] %vm211, %v190
  %217 = vst.msk [vmem:[%s2 + $0x28] sm:$0xff] %vm211, %v191
  %218 = vst.msk [vmem:[%s2 + $0x30] sm:$0xff] %vm211, %v192
  %219 = vst.msk [vmem:[%s2 + $0x38] sm:$0xff] %vm211, %v193
  %220 = vst.msk [vmem:[%s2 + $0x40] sm:$0xff] %vm211, %v194
  %221 = vst.msk [vmem:[%s2 + $0x48] sm:$0xff] %vm211, %v195
  %222 = vst.msk [vmem:[%s2 + $0x50] sm:$0xff] %vm211, %v196
  %223 = vst.msk [vmem:[%s2 + $0x58] sm:$0xff] %vm211, %v197
  %224 = vst.msk [vmem:[%s2 + $0x60] sm:$0xff] %vm211, %v198
  %225 = vst.msk [vmem:[%s2 + $0x68] sm:$0xff] %vm211, %v199
  %226 = vst.msk [vmem:[%s2 + $0x70] sm:$0xff] %vm211, %v200
  %227 = vst.msk [vmem:[%s2 + $0x78] sm:$0xff] %vm211, %v201
  %228 = vst.msk [vmem:[%s2 + $0x80] sm:$0xff] %vm211, %v202
  %229 = vst.msk [vmem:[%s2 + $0x88] sm:$0xff] %vm211, %v203
  %230 = vst.msk [vmem:[%s2 + $0x90] sm:$0xff] %vm211, %v204
  %231 = vst.msk [vmem:[%s2 + $0x98] sm:$0xff] %vm211, %v205
  %232 = vst.msk [vmem:[%s2 + $0xa0] sm:$0xff] %vm211, %v206
  %233 = vst.msk [vmem:[%s2 + $0xa8] sm:$0xff] %vm211, %v207
  %234 = vst.msk [vmem:[%s2 + $0xb0] sm:$0xff] %vm211, %v208
  %235 = vst.msk [vmem:[%s2 + $0xb8] sm:$0xff] %vm211, %v209
  %236 = vst.msk [vmem:[%s2 + $0xc0] sm:$0xff] %vm211, %v210
  // Predicated region
  $region10: #{graph_norm.3} parent=0 // pred_check
    _
  $region11: #{graph_norm.3} parent=0 // pred_check_branch
    %238 = sbr.rel (0) target = $region13
  $region12: #{graph_norm.3} parent=0 // pred_region
    _
  $region13: #{graph_norm.3} parent=0 // pred_fallthru
    _
  // Predicated region
  $region14: #{graph_norm.3} parent=0 // pred_check
    _
  $region15: #{graph_norm.3} parent=0 // pred_check_branch
    %240 = sbr.rel (0) target = $region17
  $region16: #{graph_norm.3} parent=0 // pred_region
    _
  $region17: #{graph_norm.3} parent=0 // pred_fallthru
    _

// kernel: graph_norm.2
$region0: #{graph_norm.2}
  #allocation0 [shape = 'u32[]', space=smem, size = 0x4, offset = 0x4, fixed_abs, tag = 'smem constant byte address 0x4 - core index']
  #allocation1 [shape = 'u32[144,128]{1,0:T(1,128)}', space=vmem, size = 0x12000, scoped, tag = 'internal scratch']
  #allocation2 [shape = 's32[1,128]{1,0:T(1,128)}', space=vmem, size = 0x200, scoped, tag = 'scratch operand']
  %s0 = inlined_call_operand.vmem [shape: s32[200,1], index: 0, kind: input, shape index: {}]
  %s1 = inlined_call_operand.vmem [shape: f32[1,128], index: 1, kind: output, shape index: {}]
  %s2 = sld [smem:[#allocation0]]
  $region22: #{graph_norm.2} parent=0
    _
  %s4 = ssub.s32 1, %s2
  %s5 = scalar_select 0, %s4, %s2
  // Predicated region
  $region2: #{graph_norm.2} parent=0 // pred_check
    _
  $region3: #{graph_norm.2} parent=0 // pred_check_branch
    %7 = sbr.rel (0) target = $region5
  $region4: #{graph_norm.2} parent=0 // pred_region
    _
  $region5: #{graph_norm.2} parent=0 // pred_fallthru
    _
  %p8 = scmp.eq.s32.totalorder 0, 0
  // Predicated region
  $region6: #{graph_norm.2} parent=0 // pred_check
    %p9 = pneg %p8
  $region7: #{graph_norm.2} parent=0 // pred_check_branch
    %11 = sbr.rel (%p9) target = $region9
  $region8: #{graph_norm.2} parent=0 // pred_region
    %12 = vst [vmem:[#allocation2] sm:$0x1] 0
  $region9: #{graph_norm.2} parent=0 // pred_fallthru
    _
  %v13 = vld [vmem:[%s0] sm:$0xff]
  %v14 = vld [vmem:[%s0 + $0x8] sm:$0xff]
  %v15 = vld [vmem:[%s0 + $0x10] sm:$0xff]
  %v16 = vld [vmem:[%s0 + $0x18] sm:$0xff]
  %v17 = vld [vmem:[%s0 + $0x20] sm:$0xff]
  %v18 = vld [vmem:[%s0 + $0x28] sm:$0xff]
  %v19 = vld [vmem:[%s0 + $0x30] sm:$0xff]
  %v20 = vld [vmem:[%s0 + $0x38] sm:$0xff]
  %v21 = vld [vmem:[%s0 + $0x40] sm:$0xff]
  %v22 = vld [vmem:[%s0 + $0x48] sm:$0xff]
  %v23 = vld [vmem:[%s0 + $0x50] sm:$0xff]
  %v24 = vld [vmem:[%s0 + $0x58] sm:$0xff]
  %v25 = vld [vmem:[%s0 + $0x60] sm:$0xff]
  %v26 = vld [vmem:[%s0 + $0x68] sm:$0xff]
  %v27 = vld [vmem:[%s0 + $0x70] sm:$0xff]
  %v28 = vld [vmem:[%s0 + $0x78] sm:$0xff]
  %v29 = vld [vmem:[%s0 + $0x80] sm:$0xff]
  %v30 = vld [vmem:[%s0 + $0x88] sm:$0xff]
  %v31 = vld [vmem:[%s0 + $0x90] sm:$0xff]
  %v32 = vld [vmem:[%s0 + $0x98] sm:$0xff]
  %v33 = vld [vmem:[%s0 + $0xa0] sm:$0xff]
  %v34 = vld [vmem:[%s0 + $0xa8] sm:$0xff]
  %v35 = vld [vmem:[%s0 + $0xb0] sm:$0xff]
  %v36 = vld [vmem:[%s0 + $0xb8] sm:$0xff]
  %v37 = vld [vmem:[%s0 + $0xc0] sm:$0xff]
  %v38 = vlaneseq
  %v39 = vand.u32 %v38, 127
  %40 = vset.pattern.permute.xlu0 0
  %41 = vperm.xlu0 %40, %v13
  %v42 = vpop.permute.xlu0 %41
  %43 = vset.pattern.permute.xlu0 0
  %44 = vperm.xlu0 %43, %v14
  %v45 = vpop.permute.xlu0 %44
  %46 = vset.pattern.permute.xlu0 0
  %47 = vperm.xlu0 %46, %v15
  %v48 = vpop.permute.xlu0 %47
  %49 = vset.pattern.permute.xlu0 0
  %50 = vperm.xlu0 %49, %v16
  %v51 = vpop.permute.xlu0 %50
  %52 = vset.pattern.permute.xlu0 0
  %53 = vperm.xlu0 %52, %v17
  %v54 = vpop.permute.xlu0 %53
  %55 = vset.pattern.permute.xlu0 0
  %56 = vperm.xlu0 %55, %v18
  %v57 = vpop.permute.xlu0 %56
  %58 = vset.pattern.permute.xlu0 0
  %59 = vperm.xlu0 %58, %v19
  %v60 = vpop.permute.xlu0 %59
  %61 = vset.pattern.permute.xlu0 0
  %62 = vperm.xlu0 %61, %v20
  %v63 = vpop.permute.xlu0 %62
  %64 = vset.pattern.permute.xlu0 0
  %65 = vperm.xlu0 %64, %v21
  %v66 = vpop.permute.xlu0 %65
  %67 = vset.pattern.permute.xlu0 0
  %68 = vperm.xlu0 %67, %v22
  %v69 = vpop.permute.xlu0 %68
  %70 = vset.pattern.permute.xlu0 0
  %71 = vperm.xlu0 %70, %v23
  %v72 = vpop.permute.xlu0 %71
  %73 = vset.pattern.permute.xlu0 0
  %74 = vperm.xlu0 %73, %v24
  %v75 = vpop.permute.xlu0 %74
  %76 = vset.pattern.permute.xlu0 0
  %77 = vperm.xlu0 %76, %v25
  %v78 = vpop.permute.xlu0 %77
  %79 = vset.pattern.permute.xlu0 0
  %80 = vperm.xlu0 %79, %v26
  %v81 = vpop.permute.xlu0 %80
  %82 = vset.pattern.permute.xlu0 0
  %83 = vperm.xlu0 %82, %v27
  %v84 = vpop.permute.xlu0 %83
  %85 = vset.pattern.permute.xlu0 0
  %86 = vperm.xlu0 %85, %v28
  %v87 = vpop.permute.xlu0 %86
  %88 = vset.pattern.permute.xlu0 0
  %89 = vperm.xlu0 %88, %v29
  %v90 = vpop.permute.xlu0 %89
  %91 = vset.pattern.permute.xlu0 0
  %92 = vperm.xlu0 %91, %v30
  %v93 = vpop.permute.xlu0 %92
  %94 = vset.pattern.permute.xlu0 0
  %95 = vperm.xlu0 %94, %v31
  %v96 = vpop.permute.xlu0 %95
  %97 = vset.pattern.permute.xlu0 0
  %98 = vperm.xlu0 %97, %v32
  %v99 = vpop.permute.xlu0 %98
  %100 = vset.pattern.permute.xlu0 0
  %101 = vperm.xlu0 %100, %v33
  %v102 = vpop.permute.xlu0 %101
  %103 = vset.pattern.permute.xlu0 0
  %104 = vperm.xlu0 %103, %v34
  %v105 = vpop.permute.xlu0 %104
  %106 = vset.pattern.permute.xlu0 0
  %107 = vperm.xlu0 %106, %v35
  %v108 = vpop.permute.xlu0 %107
  %109 = vset.pattern.permute.xlu0 0
  %110 = vperm.xlu0 %109, %v36
  %v111 = vpop.permute.xlu0 %110
  %112 = vset.pattern.permute.xlu0 0
  %113 = vperm.xlu0 %112, %v37
  %v114 = vpop.permute.xlu0 %113
  %vm115 = vcmp.eq.s32.totalorder %v42, %v39
  %vm116 = vcmp.eq.s32.totalorder %v45, %v39
  %vm117 = vcmp.eq.s32.totalorder %v48, %v39
  %vm118 = vcmp.eq.s32.totalorder %v51, %v39
  %vm119 = vcmp.eq.s32.totalorder %v54, %v39
  %vm120 = vcmp.eq.s32.totalorder %v57, %v39
  %vm121 = vcmp.eq.s32.totalorder %v60, %v39
  %vm122 = vcmp.eq.s32.totalorder %v63, %v39
  %vm123 = vcmp.eq.s32.totalorder %v66, %v39
  %vm124 = vcmp.eq.s32.totalorder %v69, %v39
  %vm125 = vcmp.eq.s32.totalorder %v72, %v39
  %vm126 = vcmp.eq.s32.totalorder %v75, %v39
  %vm127 = vcmp.eq.s32.totalorder %v78, %v39
  %vm128 = vcmp.eq.s32.totalorder %v81, %v39
  %vm129 = vcmp.eq.s32.totalorder %v84, %v39
  %vm130 = vcmp.eq.s32.totalorder %v87, %v39
  %vm131 = vcmp.eq.s32.totalorder %v90, %v39
  %vm132 = vcmp.eq.s32.totalorder %v93, %v39
  %vm133 = vcmp.eq.s32.totalorder %v96, %v39
  %vm134 = vcmp.eq.s32.totalorder %v99, %v39
  %vm135 = vcmp.eq.s32.totalorder %v102, %v39
  %vm136 = vcmp.eq.s32.totalorder %v105, %v39
  %vm137 = vcmp.eq.s32.totalorder %v108, %v39
  %vm138 = vcmp.eq.s32.totalorder %v111, %v39
  %vm139 = vcmp.eq.s32.totalorder %v114, %v39
  %v140 = vsel %vm115, 1, 0
  %v141 = vsel %vm116, 1, 0
  %v142 = vsel %vm117, 1, 0
  %v143 = vsel %vm118, 1, 0
  %v144 = vsel %vm119, 1, 0
  %v145 = vsel %vm120, 1, 0
  %v146 = vsel %vm121, 1, 0
  %v147 = vsel %vm122, 1, 0
  %v148 = vsel %vm123, 1, 0
  %v149 = vsel %vm124, 1, 0
  %v150 = vsel %vm125, 1, 0
  %v151 = vsel %vm126, 1, 0
  %v152 = vsel %vm127, 1, 0
  %v153 = vsel %vm128, 1, 0
  %v154 = vsel %vm129, 1, 0
  %v155 = vsel %vm130, 1, 0
  %v156 = vsel %vm131, 1, 0
  %v157 = vsel %vm132, 1, 0
  %v158 = vsel %vm133, 1, 0
  %v159 = vsel %vm134, 1, 0
  %v160 = vsel %vm135, 1, 0
  %v161 = vsel %vm136, 1, 0
  %v162 = vsel %vm137, 1, 0
  %v163 = vsel %vm138, 1, 0
  %v164 = vsel %vm139, 1, 0
  %v165 = vld [vmem:[#allocation2] sm:$0x1]
  %v166 = vadd.s32 %v140, %v144
  %v167 = vadd.s32 %v141, %v145
  %v168 = vadd.s32 %v142, %v146
  %v169 = vadd.s32 %v143, %v147
  %v170 = vadd.s32 %v166, %v148
  %v171 = vadd.s32 %v167, %v149
  %v172 = vadd.s32 %v168, %v150
  %v173 = vadd.s32 %v169, %v151
  %v174 = vadd.s32 %v170, %v152
  %v175 = vadd.s32 %v171, %v153
  %v176 = vadd.s32 %v172, %v154
  %v177 = vadd.s32 %v173, %v155
  %v178 = vadd.s32 %v174, %v156
  %v179 = vadd.s32 %v175, %v157
  %v180 = vadd.s32 %v176, %v158
  %v181 = vadd.s32 %v177, %v159
  %v182 = vadd.s32 %v178, %v160
  %v183 = vadd.s32 %v179, %v161
  %v184 = vadd.s32 %v180, %v162
  %v185 = vadd.s32 %v181, %v163
  %v186 = vadd.s32 %v182, %v164
  %v187 = vadd.s32 %v186, %v183
  %v188 = vadd.s32 %v184, %v185
  %v189 = vadd.s32 %v187, %v188
  %v190 = vrot.slane %v189, 4
  %v191 = vadd.s32 %v189, %v190
  %v192 = vrot.slane %v191, 2
  %v193 = vadd.s32 %v191, %v192
  %v194 = vrot.slane %v193, 1
  %v195 = vadd.s32 %v193, %v194
  %v196 = vadd.s32 %v165, %v195
  %197 = vst [vmem:[#allocation2] sm:$0x1] %v196
  // Predicated region
  $region10: #{graph_norm.2} parent=0 // pred_check
    %p198 = pneg %p8
  $region11: #{graph_norm.2} parent=0 // pred_check_branch
    %200 = sbr.rel (%p198) target = $region13
  $region12: #{graph_norm.2} parent=0 // pred_region
    %v201 = vld [vmem:[#allocation2] sm:$0x1]
    %v202 = vcvt.s32.f32 %v201
    %vm203 = vcmp.gt.f32.partialorder %v202, 0.0
    %v204 = vrsqrt.pop %v202
    %v205 = vsel %vm203, %v204, 1.0
    %206 = vst [vmem:[%s1] sm:$0x1] %v205
  $region13: #{graph_norm.2} parent=0 // pred_fallthru
    _
  // Predicated region
  $region14: #{graph_norm.2} parent=0 // pred_check
    _
  $region15: #{graph_norm.2} parent=0 // pred_check_branch
    %208 = sbr.rel (0) target = $region17
  $region16: #{graph_norm.2} parent=0 // pred_region
    _
  $region17: #{graph_norm.2} parent=0 // pred_fallthru
    _
  // Predicated region
  $region18: #{graph_norm.2} parent=0 // pred_check
    _
  $region19: #{graph_norm.2} parent=0 // pred_check_branch
    %210 = sbr.rel (0) target = $region21
  $region20: #{graph_norm.2} parent=0 // pred_region
    _
  $region21: #{graph_norm.2} parent=0 // pred_fallthru
    _

</llo_original>
